<compile_context>
chip_gen: v5e
topology: v5e:2x2
jax: 0.10.0
libtpu: 0.0.40
codegen_flags: <defaults>
</compile_context>

<pallas_src>
import jax
import jax.numpy as jnp
import numpy as np
from jax import lax
from jax.experimental import pallas as pl
from jax.experimental.pallas import tpu as pltpu

# ---- model_config equivalent (small, deterministic) ------------------------
N_LAYERS = 1          # dropout = 0 since n_layers == 1 (matches the module)
INPUT_DIM = 16
HIDDEN_DIM = 32       # 4H = 128 -> one full lane dim
OUTPUT_DIM = 8
BIDIRECTIONAL = True

SEQ_LEN = 8
BATCH = 2
B_PAD = 8             # pad batch to the 8-sublane tile (rows are independent)


# ---- the kernel --------------------------------------------------------------
def lstm_classifier_kernel(x_ref,        # (T*B_PAD, I)
                           wih_f_ref,    # (I, 4H)  forward W_ih^T, gate order [i,f,o,g]
                           bf_ref,       # (1, 4H)  forward b_ih + b_hh, [i,f,o,g]
                           wih_b_ref,    # (I, 4H)  backward W_ih^T, [i,f,o,g]
                           bb_ref,       # (1, 4H)  backward b_ih + b_hh, [i,f,o,g]
                           whh_b_ref,    # (H, 4H)  backward W_hh^T, [i,f,o,g]
                           wout_ref,     # (H, O)
                           bout_ref,     # (1, O)
                           o_ref):       # (B_PAD, O)
    H = HIDDEN_DIM
    T = SEQ_LEN
    B = B_PAD

    def act(gates):
        # Gate order [i, f, o, g]: one sigmoid over lanes [:3H], one tanh over [3H:].
        ifo = jax.nn.sigmoid(gates[:, :3 * H])
        g = jnp.tanh(gates[:, 3 * H:])
        return ifo[:, :H], ifo[:, H:2 * H], ifo[:, 2 * H:3 * H], g

    def cell_zero(gx_t):
        # LSTM step with h_prev = c_prev = 0: gates = gx_t, c = i*g, h = o*tanh(c).
        i, _, o, g = act(gx_t)
        c = i * g
        return o * jnp.tanh(c), c

    def cell(gx_t, h, c, whh_T):
        # Input projection + biases already folded into gx_t.
        gates = gx_t + jnp.dot(h, whh_T, preferred_element_type=jnp.float32)
        i, f, o, g = act(gates)
        c_new = f * c + i * g
        return o * jnp.tanh(c_new), c_new

    # Hoisted input projections (off the serial chain, both on the MXU):
    #   backward gates for every timestep; forward gates for t = 0 only.
    gx_b = jnp.dot(x_ref[...], wih_b_ref[...],
                   preferred_element_type=jnp.float32) + bb_ref[...]      # (T*B, 4H)
    gx_f0 = jnp.dot(x_ref[0:B, :], wih_f_ref[...],
                    preferred_element_type=jnp.float32) + bf_ref[...]     # (B, 4H)

    # Forward direction: single zero-state step (only rnn_output[0] is consumed).
    h_f, _ = cell_zero(gx_f0)

    # Backward direction: final carry after t = T-1 .. 0 is the reverse half of
    # rnn_output[0].  Fully unrolled; W_hh_b is loop-invariant (RHS stays staged).
    whh_b = whh_b_ref[...]
    h_b, c_b = cell_zero(gx_b[(T - 1) * B:T * B, :])            # t = T-1, zero state
    for t in range(T - 2, -1, -1):                              # t = T-2 .. 0
        h_b, c_b = cell(gx_b[t * B:(t + 1) * B, :], h_b, c_b, whh_b)

    # rnn_output[0][:, :H] + rnn_output[0][:, H:]
    h_t0 = h_f + h_b

    # Linear head + softmax over the class axis.
    logits = jnp.dot(h_t0, wout_ref[...],
                     preferred_element_type=jnp.float32) + bout_ref[...]
    m = jnp.max(logits, axis=1, keepdims=True)
    e = jnp.exp(logits - m)
    denom = jnp.sum(e, axis=1, keepdims=True)
    r = pl.reciprocal(denom, approx=True)       # EUP vrcp (idle slot)
    r = r * (2.0 - denom * r)                   # one Newton step -> f32-accurate
    o_ref[...] = e * r


def lstm_classifier(x, kernel_params):
    """x: (T, B, I) seq-major float32.  Returns (B, OUTPUT_DIM) softmax scores."""
    T, B, I = x.shape
    # Pad batch to the 8-sublane tile; rows are independent so results are exact.
    x_p = jnp.zeros((T, B_PAD, I), x.dtype).at[:, :B, :].set(x)
    x2d = x_p.reshape(T * B_PAD, I)

    vmem = pl.BlockSpec(memory_space=pltpu.MemorySpace.VMEM)
    out = pl.pallas_call(
        lstm_classifier_kernel,
        out_shape=jax.ShapeDtypeStruct((B_PAD, OUTPUT_DIM), jnp.float32),
        in_specs=[vmem] * 8,
        out_specs=vmem,
    )(x2d, *kernel_params)
    return out[:B]


# ---- pure-JAX reference (full bidirectional LSTM, for correctness check) ----
def ref_forward(x, wih_f, whh_f, b_f, wih_b, whh_b, b_b, wout, bout):
    T, B, _ = x.shape
    H = HIDDEN_DIM

    def cell(carry, x_t, wih_T, whh_T, b):
        h, c = carry
        gates = x_t @ wih_T + h @ whh_T + b
        i = jax.nn.sigmoid(gates[:, :H])
        f = jax.nn.sigmoid(gates[:, H:2 * H])
        g = jnp.tanh(gates[:, 2 * H:3 * H])
        o = jax.nn.sigmoid(gates[:, 3 * H:])
        c = f * c + i * g
        h = o * jnp.tanh(c)
        return (h, c), h

    h0 = jnp.zeros((B, H), jnp.float32)
    c0 = jnp.zeros((B, H), jnp.float32)
    _, outs_f = lax.scan(lambda cr, xt: cell(cr, xt, wih_f, whh_f, b_f), (h0, c0), x)
    _, outs_b = lax.scan(lambda cr, xt: cell(cr, xt, wih_b, whh_b, b_b), (h0, c0), x[::-1])
    outs_b = outs_b[::-1]
    h_t0 = outs_f[0] + outs_b[0]
    logits = h_t0 @ wout + bout
    return jax.nn.softmax(logits, axis=1)


def _permute_gates(w):
    """Reorder PyTorch gate blocks [i, f, g, o] -> [i, f, o, g] along axis 0."""
    H = HIDDEN_DIM
    return jnp.concatenate([w[:2 * H], w[3 * H:4 * H], w[2 * H:3 * H]], axis=0)


def make_params(key):
    """Deterministic PyTorch-style init: U(-k, k), k = 1/sqrt(hidden_dim)."""
    k = 1.0 / np.sqrt(HIDDEN_DIM)
    ks = jax.random.split(key, 10)
    u = lambda kk, shape: jax.random.uniform(kk, shape, jnp.float32, -k, k)

    H, I, O = HIDDEN_DIM, INPUT_DIM, OUTPUT_DIM
    # forward direction (PyTorch gate order [i, f, g, o])
    wih_f = u(ks[0], (4 * H, I))
    whh_f = u(ks[1], (4 * H, H))
    b_f = u(ks[2], (4 * H,)) + u(ks[3], (4 * H,))     # b_ih + b_hh
    # backward direction
    wih_b = u(ks[4], (4 * H, I))
    whh_b = u(ks[5], (4 * H, H))
    b_b = u(ks[6], (4 * H,)) + u(ks[7], (4 * H,))
    # Linear head
    wout = u(ks[8], (O, H))
    bout = u(ks[9], (O,))

    ref_params = (wih_f.T, whh_f.T, b_f.reshape(1, 4 * H),
                  wih_b.T, whh_b.T, b_b.reshape(1, 4 * H),
                  wout.T, bout.reshape(1, O))

    # Kernel layout: gate blocks permuted to [i, f, o, g] so activations are a
    # single sigmoid over [:3H] and a single tanh over [3H:]; weights pre-
    # transposed; W_hh_f is provably unused (only rnn_output[0] is consumed).
    kernel_params = (
        _permute_gates(wih_f).T,                    # (I, 4H) forward input proj
        _permute_gates(b_f).reshape(1, 4 * H),      # (1, 4H)
        _permute_gates(wih_b).T,                    # (I, 4H) backward input proj
        _permute_gates(b_b).reshape(1, 4 * H),      # (1, 4H)
        _permute_gates(whh_b).T,                    # (H, 4H) backward recurrent
        wout.T,                                     # (H, O)
        bout.reshape(1, O),                         # (1, O)
    )
    return ref_params, kernel_params


if __name__ == "__main__":
    key = jax.random.PRNGKey(0)
    k_x, k_p = jax.random.split(key)
    x = jax.random.normal(k_x, (SEQ_LEN, BATCH, INPUT_DIM), jnp.float32)
    ref_params, kernel_params = make_params(k_p)

    out = jax.block_until_ready(lstm_classifier(x, kernel_params))
    ref = jax.block_until_ready(ref_forward(x, *ref_params))

    np.testing.assert_allclose(np.asarray(out), np.asarray(ref), rtol=1e-5, atol=1e-5)
    assert out.shape == (BATCH, OUTPUT_DIM)
    np.testing.assert_allclose(np.asarray(out).sum(axis=1), np.ones(BATCH), rtol=1e-5)

    print("KERNEL_OK")
</pallas_src>

<mosaic_0001>
module attributes {stable_mosaic.version = 11 : i64} {
  func.func @lstm_classifier_kernel(%arg0: memref<64x16xf32, #tpu.memory_space<vmem>>, %arg1: memref<16x128xf32, #tpu.memory_space<vmem>>, %arg2: memref<1x128xf32, #tpu.memory_space<vmem>>, %arg3: memref<16x128xf32, #tpu.memory_space<vmem>>, %arg4: memref<1x128xf32, #tpu.memory_space<vmem>>, %arg5: memref<32x128xf32, #tpu.memory_space<vmem>>, %arg6: memref<32x8xf32, #tpu.memory_space<vmem>>, %arg7: memref<1x8xf32, #tpu.memory_space<vmem>>, %arg8: memref<8x8xf32, #tpu.memory_space<vmem>>) attributes {dimension_semantics = [], scalar_prefetch = 0 : i64, scratch_operands = 0 : i64, tpu.core_type = #tpu.core_type<tc>} {
    %c0 = arith.constant 0 : index
    %c0_0 = arith.constant 0 : index
    %0 = vector.load %arg0[%c0, %c0_0] : memref<64x16xf32, #tpu.memory_space<vmem>>, vector<64x16xf32>
    %c0_1 = arith.constant 0 : index
    %c0_2 = arith.constant 0 : index
    %1 = vector.load %arg3[%c0_1, %c0_2] : memref<16x128xf32, #tpu.memory_space<vmem>>, vector<16x128xf32>
    %cst = arith.constant dense<0.000000e+00> : vector<64x128xf32>
    %2 = tpu.matmul %0, %1, %cst {dimension_numbers = #tpu.dot_dimension_numbers<[1], [0], [0], [1], [0, 0, 1, 1], [], []>} : vector<64x16xf32>, vector<16x128xf32>, vector<64x128xf32> -> vector<64x128xf32>
    %c0_3 = arith.constant 0 : index
    %c0_4 = arith.constant 0 : index
    %3 = vector.load %arg4[%c0_3, %c0_4] : memref<1x128xf32, #tpu.memory_space<vmem>>, vector<1x128xf32>
    %4 = vector.broadcast %3 : vector<1x128xf32> to vector<64x128xf32>
    %5 = arith.addf %2, %4 : vector<64x128xf32>
    %c0_5 = arith.constant 0 : index
    %c0_6 = arith.constant 0 : index
    %6 = vector.load %arg0[%c0_5, %c0_6] : memref<64x16xf32, #tpu.memory_space<vmem>>, vector<8x16xf32>
    %c0_7 = arith.constant 0 : index
    %c0_8 = arith.constant 0 : index
    %7 = vector.load %arg1[%c0_7, %c0_8] : memref<16x128xf32, #tpu.memory_space<vmem>>, vector<16x128xf32>
    %cst_9 = arith.constant dense<0.000000e+00> : vector<8x128xf32>
    %8 = tpu.matmul %6, %7, %cst_9 {dimension_numbers = #tpu.dot_dimension_numbers<[1], [0], [0], [1], [0, 0, 1, 1], [], []>} : vector<8x16xf32>, vector<16x128xf32>, vector<8x128xf32> -> vector<8x128xf32>
    %c0_10 = arith.constant 0 : index
    %c0_11 = arith.constant 0 : index
    %9 = vector.load %arg2[%c0_10, %c0_11] : memref<1x128xf32, #tpu.memory_space<vmem>>, vector<1x128xf32>
    %10 = vector.broadcast %9 : vector<1x128xf32> to vector<8x128xf32>
    %11 = arith.addf %8, %10 : vector<8x128xf32>
    %12 = vector.extract_strided_slice %11 {offsets = [0, 0], sizes = [8, 96], strides = [1, 1]} : vector<8x128xf32> to vector<8x96xf32>
    %13 = arith.negf %12 : vector<8x96xf32>
    %14 = math.exp %13 : vector<8x96xf32>
    %cst_12 = arith.constant 1.000000e+00 : f32
    %15 = vector.broadcast %cst_12 : f32 to vector<8x96xf32>
    %16 = arith.addf %15, %14 : vector<8x96xf32>
    %17 = arith.divf %15, %16 : vector<8x96xf32>
    %18 = vector.extract_strided_slice %11 {offsets = [0, 96], sizes = [8, 32], strides = [1, 1]} : vector<8x128xf32> to vector<8x32xf32>
    %19 = math.tanh %18 : vector<8x32xf32>
    %20 = vector.extract_strided_slice %17 {offsets = [0, 0], sizes = [8, 32], strides = [1, 1]} : vector<8x96xf32> to vector<8x32xf32>
    %21 = vector.extract_strided_slice %17 {offsets = [0, 64], sizes = [8, 32], strides = [1, 1]} : vector<8x96xf32> to vector<8x32xf32>
    %22 = arith.mulf %20, %19 : vector<8x32xf32>
    %23 = math.tanh %22 : vector<8x32xf32>
    %24 = arith.mulf %21, %23 : vector<8x32xf32>
    %c0_13 = arith.constant 0 : index
    %c0_14 = arith.constant 0 : index
    %25 = vector.load %arg5[%c0_13, %c0_14] : memref<32x128xf32, #tpu.memory_space<vmem>>, vector<32x128xf32>
    %26 = vector.extract_strided_slice %5 {offsets = [56, 0], sizes = [8, 128], strides = [1, 1]} : vector<64x128xf32> to vector<8x128xf32>
    %27 = vector.extract_strided_slice %26 {offsets = [0, 0], sizes = [8, 96], strides = [1, 1]} : vector<8x128xf32> to vector<8x96xf32>
    %28 = arith.negf %27 : vector<8x96xf32>
    %29 = math.exp %28 : vector<8x96xf32>
    %cst_15 = arith.constant 1.000000e+00 : f32
    %30 = vector.broadcast %cst_15 : f32 to vector<8x96xf32>
    %31 = arith.addf %30, %29 : vector<8x96xf32>
    %32 = arith.divf %30, %31 : vector<8x96xf32>
    %33 = vector.extract_strided_slice %26 {offsets = [0, 96], sizes = [8, 32], strides = [1, 1]} : vector<8x128xf32> to vector<8x32xf32>
    %34 = math.tanh %33 : vector<8x32xf32>
    %35 = vector.extract_strided_slice %32 {offsets = [0, 0], sizes = [8, 32], strides = [1, 1]} : vector<8x96xf32> to vector<8x32xf32>
    %36 = vector.extract_strided_slice %32 {offsets = [0, 64], sizes = [8, 32], strides = [1, 1]} : vector<8x96xf32> to vector<8x32xf32>
    %37 = arith.mulf %35, %34 : vector<8x32xf32>
    %38 = math.tanh %37 : vector<8x32xf32>
    %39 = arith.mulf %36, %38 : vector<8x32xf32>
    %40 = vector.extract_strided_slice %5 {offsets = [48, 0], sizes = [8, 128], strides = [1, 1]} : vector<64x128xf32> to vector<8x128xf32>
    %cst_16 = arith.constant dense<0.000000e+00> : vector<8x128xf32>
    %41 = tpu.matmul %39, %25, %cst_16 {dimension_numbers = #tpu.dot_dimension_numbers<[1], [0], [0], [1], [0, 0, 1, 1], [], []>} : vector<8x32xf32>, vector<32x128xf32>, vector<8x128xf32> -> vector<8x128xf32>
    %42 = arith.addf %40, %41 : vector<8x128xf32>
    %43 = vector.extract_strided_slice %42 {offsets = [0, 0], sizes = [8, 96], strides = [1, 1]} : vector<8x128xf32> to vector<8x96xf32>
    %44 = arith.negf %43 : vector<8x96xf32>
    %45 = math.exp %44 : vector<8x96xf32>
    %cst_17 = arith.constant 1.000000e+00 : f32
    %46 = vector.broadcast %cst_17 : f32 to vector<8x96xf32>
    %47 = arith.addf %46, %45 : vector<8x96xf32>
    %48 = arith.divf %46, %47 : vector<8x96xf32>
    %49 = vector.extract_strided_slice %42 {offsets = [0, 96], sizes = [8, 32], strides = [1, 1]} : vector<8x128xf32> to vector<8x32xf32>
    %50 = math.tanh %49 : vector<8x32xf32>
    %51 = vector.extract_strided_slice %48 {offsets = [0, 0], sizes = [8, 32], strides = [1, 1]} : vector<8x96xf32> to vector<8x32xf32>
    %52 = vector.extract_strided_slice %48 {offsets = [0, 32], sizes = [8, 32], strides = [1, 1]} : vector<8x96xf32> to vector<8x32xf32>
    %53 = vector.extract_strided_slice %48 {offsets = [0, 64], sizes = [8, 32], strides = [1, 1]} : vector<8x96xf32> to vector<8x32xf32>
    %54 = arith.mulf %52, %37 : vector<8x32xf32>
    %55 = arith.mulf %51, %50 : vector<8x32xf32>
    %56 = arith.addf %54, %55 : vector<8x32xf32>
    %57 = math.tanh %56 : vector<8x32xf32>
    %58 = arith.mulf %53, %57 : vector<8x32xf32>
    %59 = vector.extract_strided_slice %5 {offsets = [40, 0], sizes = [8, 128], strides = [1, 1]} : vector<64x128xf32> to vector<8x128xf32>
    %cst_18 = arith.constant dense<0.000000e+00> : vector<8x128xf32>
    %60 = tpu.matmul %58, %25, %cst_18 {dimension_numbers = #tpu.dot_dimension_numbers<[1], [0], [0], [1], [0, 0, 1, 1], [], []>} : vector<8x32xf32>, vector<32x128xf32>, vector<8x128xf32> -> vector<8x128xf32>
    %61 = arith.addf %59, %60 : vector<8x128xf32>
    %62 = vector.extract_strided_slice %61 {offsets = [0, 0], sizes = [8, 96], strides = [1, 1]} : vector<8x128xf32> to vector<8x96xf32>
    %63 = arith.negf %62 : vector<8x96xf32>
    %64 = math.exp %63 : vector<8x96xf32>
    %cst_19 = arith.constant 1.000000e+00 : f32
    %65 = vector.broadcast %cst_19 : f32 to vector<8x96xf32>
    %66 = arith.addf %65, %64 : vector<8x96xf32>
    %67 = arith.divf %65, %66 : vector<8x96xf32>
    %68 = vector.extract_strided_slice %61 {offsets = [0, 96], sizes = [8, 32], strides = [1, 1]} : vector<8x128xf32> to vector<8x32xf32>
    %69 = math.tanh %68 : vector<8x32xf32>
    %70 = vector.extract_strided_slice %67 {offsets = [0, 0], sizes = [8, 32], strides = [1, 1]} : vector<8x96xf32> to vector<8x32xf32>
    %71 = vector.extract_strided_slice %67 {offsets = [0, 32], sizes = [8, 32], strides = [1, 1]} : vector<8x96xf32> to vector<8x32xf32>
    %72 = vector.extract_strided_slice %67 {offsets = [0, 64], sizes = [8, 32], strides = [1, 1]} : vector<8x96xf32> to vector<8x32xf32>
    %73 = arith.mulf %71, %56 : vector<8x32xf32>
    %74 = arith.mulf %70, %69 : vector<8x32xf32>
    %75 = arith.addf %73, %74 : vector<8x32xf32>
    %76 = math.tanh %75 : vector<8x32xf32>
    %77 = arith.mulf %72, %76 : vector<8x32xf32>
    %78 = vector.extract_strided_slice %5 {offsets = [32, 0], sizes = [8, 128], strides = [1, 1]} : vector<64x128xf32> to vector<8x128xf32>
    %cst_20 = arith.constant dense<0.000000e+00> : vector<8x128xf32>
    %79 = tpu.matmul %77, %25, %cst_20 {dimension_numbers = #tpu.dot_dimension_numbers<[1], [0], [0], [1], [0, 0, 1, 1], [], []>} : vector<8x32xf32>, vector<32x128xf32>, vector<8x128xf32> -> vector<8x128xf32>
    %80 = arith.addf %78, %79 : vector<8x128xf32>
    %81 = vector.extract_strided_slice %80 {offsets = [0, 0], sizes = [8, 96], strides = [1, 1]} : vector<8x128xf32> to vector<8x96xf32>
    %82 = arith.negf %81 : vector<8x96xf32>
    %83 = math.exp %82 : vector<8x96xf32>
    %cst_21 = arith.constant 1.000000e+00 : f32
    %84 = vector.broadcast %cst_21 : f32 to vector<8x96xf32>
    %85 = arith.addf %84, %83 : vector<8x96xf32>
    %86 = arith.divf %84, %85 : vector<8x96xf32>
    %87 = vector.extract_strided_slice %80 {offsets = [0, 96], sizes = [8, 32], strides = [1, 1]} : vector<8x128xf32> to vector<8x32xf32>
    %88 = math.tanh %87 : vector<8x32xf32>
    %89 = vector.extract_strided_slice %86 {offsets = [0, 0], sizes = [8, 32], strides = [1, 1]} : vector<8x96xf32> to vector<8x32xf32>
    %90 = vector.extract_strided_slice %86 {offsets = [0, 32], sizes = [8, 32], strides = [1, 1]} : vector<8x96xf32> to vector<8x32xf32>
    %91 = vector.extract_strided_slice %86 {offsets = [0, 64], sizes = [8, 32], strides = [1, 1]} : vector<8x96xf32> to vector<8x32xf32>
    %92 = arith.mulf %90, %75 : vector<8x32xf32>
    %93 = arith.mulf %89, %88 : vector<8x32xf32>
    %94 = arith.addf %92, %93 : vector<8x32xf32>
    %95 = math.tanh %94 : vector<8x32xf32>
    %96 = arith.mulf %91, %95 : vector<8x32xf32>
    %97 = vector.extract_strided_slice %5 {offsets = [24, 0], sizes = [8, 128], strides = [1, 1]} : vector<64x128xf32> to vector<8x128xf32>
    %cst_22 = arith.constant dense<0.000000e+00> : vector<8x128xf32>
    %98 = tpu.matmul %96, %25, %cst_22 {dimension_numbers = #tpu.dot_dimension_numbers<[1], [0], [0], [1], [0, 0, 1, 1], [], []>} : vector<8x32xf32>, vector<32x128xf32>, vector<8x128xf32> -> vector<8x128xf32>
    %99 = arith.addf %97, %98 : vector<8x128xf32>
    %100 = vector.extract_strided_slice %99 {offsets = [0, 0], sizes = [8, 96], strides = [1, 1]} : vector<8x128xf32> to vector<8x96xf32>
    %101 = arith.negf %100 : vector<8x96xf32>
    %102 = math.exp %101 : vector<8x96xf32>
    %cst_23 = arith.constant 1.000000e+00 : f32
    %103 = vector.broadcast %cst_23 : f32 to vector<8x96xf32>
    %104 = arith.addf %103, %102 : vector<8x96xf32>
    %105 = arith.divf %103, %104 : vector<8x96xf32>
    %106 = vector.extract_strided_slice %99 {offsets = [0, 96], sizes = [8, 32], strides = [1, 1]} : vector<8x128xf32> to vector<8x32xf32>
    %107 = math.tanh %106 : vector<8x32xf32>
    %108 = vector.extract_strided_slice %105 {offsets = [0, 0], sizes = [8, 32], strides = [1, 1]} : vector<8x96xf32> to vector<8x32xf32>
    %109 = vector.extract_strided_slice %105 {offsets = [0, 32], sizes = [8, 32], strides = [1, 1]} : vector<8x96xf32> to vector<8x32xf32>
    %110 = vector.extract_strided_slice %105 {offsets = [0, 64], sizes = [8, 32], strides = [1, 1]} : vector<8x96xf32> to vector<8x32xf32>
    %111 = arith.mulf %109, %94 : vector<8x32xf32>
    %112 = arith.mulf %108, %107 : vector<8x32xf32>
    %113 = arith.addf %111, %112 : vector<8x32xf32>
    %114 = math.tanh %113 : vector<8x32xf32>
    %115 = arith.mulf %110, %114 : vector<8x32xf32>
    %116 = vector.extract_strided_slice %5 {offsets = [16, 0], sizes = [8, 128], strides = [1, 1]} : vector<64x128xf32> to vector<8x128xf32>
    %cst_24 = arith.constant dense<0.000000e+00> : vector<8x128xf32>
    %117 = tpu.matmul %115, %25, %cst_24 {dimension_numbers = #tpu.dot_dimension_numbers<[1], [0], [0], [1], [0, 0, 1, 1], [], []>} : vector<8x32xf32>, vector<32x128xf32>, vector<8x128xf32> -> vector<8x128xf32>
    %118 = arith.addf %116, %117 : vector<8x128xf32>
    %119 = vector.extract_strided_slice %118 {offsets = [0, 0], sizes = [8, 96], strides = [1, 1]} : vector<8x128xf32> to vector<8x96xf32>
    %120 = arith.negf %119 : vector<8x96xf32>
    %121 = math.exp %120 : vector<8x96xf32>
    %cst_25 = arith.constant 1.000000e+00 : f32
    %122 = vector.broadcast %cst_25 : f32 to vector<8x96xf32>
    %123 = arith.addf %122, %121 : vector<8x96xf32>
    %124 = arith.divf %122, %123 : vector<8x96xf32>
    %125 = vector.extract_strided_slice %118 {offsets = [0, 96], sizes = [8, 32], strides = [1, 1]} : vector<8x128xf32> to vector<8x32xf32>
    %126 = math.tanh %125 : vector<8x32xf32>
    %127 = vector.extract_strided_slice %124 {offsets = [0, 0], sizes = [8, 32], strides = [1, 1]} : vector<8x96xf32> to vector<8x32xf32>
    %128 = vector.extract_strided_slice %124 {offsets = [0, 32], sizes = [8, 32], strides = [1, 1]} : vector<8x96xf32> to vector<8x32xf32>
    %129 = vector.extract_strided_slice %124 {offsets = [0, 64], sizes = [8, 32], strides = [1, 1]} : vector<8x96xf32> to vector<8x32xf32>
    %130 = arith.mulf %128, %113 : vector<8x32xf32>
    %131 = arith.mulf %127, %126 : vector<8x32xf32>
    %132 = arith.addf %130, %131 : vector<8x32xf32>
    %133 = math.tanh %132 : vector<8x32xf32>
    %134 = arith.mulf %129, %133 : vector<8x32xf32>
    %135 = vector.extract_strided_slice %5 {offsets = [8, 0], sizes = [8, 128], strides = [1, 1]} : vector<64x128xf32> to vector<8x128xf32>
    %cst_26 = arith.constant dense<0.000000e+00> : vector<8x128xf32>
    %136 = tpu.matmul %134, %25, %cst_26 {dimension_numbers = #tpu.dot_dimension_numbers<[1], [0], [0], [1], [0, 0, 1, 1], [], []>} : vector<8x32xf32>, vector<32x128xf32>, vector<8x128xf32> -> vector<8x128xf32>
    %137 = arith.addf %135, %136 : vector<8x128xf32>
    %138 = vector.extract_strided_slice %137 {offsets = [0, 0], sizes = [8, 96], strides = [1, 1]} : vector<8x128xf32> to vector<8x96xf32>
    %139 = arith.negf %138 : vector<8x96xf32>
    %140 = math.exp %139 : vector<8x96xf32>
    %cst_27 = arith.constant 1.000000e+00 : f32
    %141 = vector.broadcast %cst_27 : f32 to vector<8x96xf32>
    %142 = arith.addf %141, %140 : vector<8x96xf32>
    %143 = arith.divf %141, %142 : vector<8x96xf32>
    %144 = vector.extract_strided_slice %137 {offsets = [0, 96], sizes = [8, 32], strides = [1, 1]} : vector<8x128xf32> to vector<8x32xf32>
    %145 = math.tanh %144 : vector<8x32xf32>
    %146 = vector.extract_strided_slice %143 {offsets = [0, 0], sizes = [8, 32], strides = [1, 1]} : vector<8x96xf32> to vector<8x32xf32>
    %147 = vector.extract_strided_slice %143 {offsets = [0, 32], sizes = [8, 32], strides = [1, 1]} : vector<8x96xf32> to vector<8x32xf32>
    %148 = vector.extract_strided_slice %143 {offsets = [0, 64], sizes = [8, 32], strides = [1, 1]} : vector<8x96xf32> to vector<8x32xf32>
    %149 = arith.mulf %147, %132 : vector<8x32xf32>
    %150 = arith.mulf %146, %145 : vector<8x32xf32>
    %151 = arith.addf %149, %150 : vector<8x32xf32>
    %152 = math.tanh %151 : vector<8x32xf32>
    %153 = arith.mulf %148, %152 : vector<8x32xf32>
    %154 = vector.extract_strided_slice %5 {offsets = [0, 0], sizes = [8, 128], strides = [1, 1]} : vector<64x128xf32> to vector<8x128xf32>
    %cst_28 = arith.constant dense<0.000000e+00> : vector<8x128xf32>
    %155 = tpu.matmul %153, %25, %cst_28 {dimension_numbers = #tpu.dot_dimension_numbers<[1], [0], [0], [1], [0, 0, 1, 1], [], []>} : vector<8x32xf32>, vector<32x128xf32>, vector<8x128xf32> -> vector<8x128xf32>
    %156 = arith.addf %154, %155 : vector<8x128xf32>
    %157 = vector.extract_strided_slice %156 {offsets = [0, 0], sizes = [8, 96], strides = [1, 1]} : vector<8x128xf32> to vector<8x96xf32>
    %158 = arith.negf %157 : vector<8x96xf32>
    %159 = math.exp %158 : vector<8x96xf32>
    %cst_29 = arith.constant 1.000000e+00 : f32
    %160 = vector.broadcast %cst_29 : f32 to vector<8x96xf32>
    %161 = arith.addf %160, %159 : vector<8x96xf32>
    %162 = arith.divf %160, %161 : vector<8x96xf32>
    %163 = vector.extract_strided_slice %156 {offsets = [0, 96], sizes = [8, 32], strides = [1, 1]} : vector<8x128xf32> to vector<8x32xf32>
    %164 = math.tanh %163 : vector<8x32xf32>
    %165 = vector.extract_strided_slice %162 {offsets = [0, 0], sizes = [8, 32], strides = [1, 1]} : vector<8x96xf32> to vector<8x32xf32>
    %166 = vector.extract_strided_slice %162 {offsets = [0, 32], sizes = [8, 32], strides = [1, 1]} : vector<8x96xf32> to vector<8x32xf32>
    %167 = vector.extract_strided_slice %162 {offsets = [0, 64], sizes = [8, 32], strides = [1, 1]} : vector<8x96xf32> to vector<8x32xf32>
    %168 = arith.mulf %166, %151 : vector<8x32xf32>
    %169 = arith.mulf %165, %164 : vector<8x32xf32>
    %170 = arith.addf %168, %169 : vector<8x32xf32>
    %171 = math.tanh %170 : vector<8x32xf32>
    %172 = arith.mulf %167, %171 : vector<8x32xf32>
    %173 = arith.addf %24, %172 : vector<8x32xf32>
    %c0_30 = arith.constant 0 : index
    %c0_31 = arith.constant 0 : index
    %174 = vector.load %arg6[%c0_30, %c0_31] : memref<32x8xf32, #tpu.memory_space<vmem>>, vector<32x8xf32>
    %cst_32 = arith.constant dense<0.000000e+00> : vector<8x8xf32>
    %175 = tpu.matmul %173, %174, %cst_32 {dimension_numbers = #tpu.dot_dimension_numbers<[1], [0], [0], [1], [0, 0, 1, 1], [], []>} : vector<8x32xf32>, vector<32x8xf32>, vector<8x8xf32> -> vector<8x8xf32>
    %c0_33 = arith.constant 0 : index
    %c0_34 = arith.constant 0 : index
    %176 = vector.load %arg7[%c0_33, %c0_34] : memref<1x8xf32, #tpu.memory_space<vmem>>, vector<1x8xf32>
    %177 = vector.broadcast %176 : vector<1x8xf32> to vector<8x8xf32>
    %178 = arith.addf %175, %177 : vector<8x8xf32>
    %cst_35 = arith.constant dense<0xFF800000> : vector<8xf32>
    %179 = vector.multi_reduction <maximumf>, %178, %cst_35 [1] : vector<8x8xf32> to vector<8xf32>
    %180 = vector.shape_cast %179 : vector<8xf32> to vector<8x1xf32>
    %181 = vector.broadcast %180 : vector<8x1xf32> to vector<8x8xf32>
    %182 = arith.subf %178, %181 : vector<8x8xf32>
    %183 = math.exp %182 : vector<8x8xf32>
    %cst_36 = arith.constant dense<0.000000e+00> : vector<8xf32>
    %184 = vector.multi_reduction <add>, %183, %cst_36 [1] : vector<8x8xf32> to vector<8xf32>
    %185 = vector.shape_cast %184 : vector<8xf32> to vector<8x1xf32>
    %186 = tpu.reciprocal %185 {approx = true} : vector<8x1xf32> -> vector<8x1xf32>
    %187 = arith.mulf %185, %186 : vector<8x1xf32>
    %cst_37 = arith.constant 2.000000e+00 : f32
    %188 = vector.broadcast %cst_37 : f32 to vector<8x1xf32>
    %189 = arith.subf %188, %187 : vector<8x1xf32>
    %190 = arith.mulf %186, %189 : vector<8x1xf32>
    %191 = vector.broadcast %190 : vector<8x1xf32> to vector<8x8xf32>
    %192 = arith.mulf %183, %191 : vector<8x8xf32>
    %c0_38 = arith.constant 0 : index
    %c0_39 = arith.constant 0 : index
    %193 = vector.load %arg8[%c0_38, %c0_39] : memref<8x8xf32, #tpu.memory_space<vmem>>, vector<8x8xf32>
    tpu.vector_store %arg8[%c0_38, %c0_39], %192 {strides = array<i32>} : memref<8x8xf32, #tpu.memory_space<vmem>>, vector<8x8xf32>,
    return
  }
}

</mosaic_0001>

<llo_original>
// kernel: tpu_custom_call.1
$region0: #{tpu_custom_call.1}
  #allocation0 [shape = 'u32[]', space=smem, size = 0x4, offset = 0x4, fixed_abs, tag = 'smem constant byte address 0x4 - core index']
  #allocation1 [shape = 'u32[72,128]{1,0:T(1,128)}', space=vmem, size = 0x9000, scoped, tag = 'internal scratch']
  %s0 = inlined_call_operand.vmem [shape: f32[64,16], index: 0, kind: input, shape index: {}]
  %s1 = inlined_call_operand.vmem [shape: f32[16,128], index: 1, kind: input, shape index: {}]
  %s2 = inlined_call_operand.vmem [shape: f32[1,128], index: 2, kind: input, shape index: {}]
  %s3 = inlined_call_operand.vmem [shape: f32[16,128], index: 3, kind: input, shape index: {}]
  %s4 = inlined_call_operand.vmem [shape: f32[1,128], index: 4, kind: input, shape index: {}]
  %s5 = inlined_call_operand.vmem [shape: f32[32,128], index: 5, kind: input, shape index: {}]
  %s6 = inlined_call_operand.vmem [shape: f32[32,8], index: 6, kind: input, shape index: {}]
  %s7 = inlined_call_operand.vmem [shape: f32[1,8], index: 7, kind: input, shape index: {}]
  %s8 = inlined_call_operand.hbm [shape: f32[8,8], index: 8, kind: output, shape index: {}]
  %s9 = sld [smem:[#allocation0]]
  $region42: #{tpu_custom_call.1} parent=0
    _
  %s11 = ssub.s32 1, %s9
  %s12 = scalar_select 0, %s11, %s9
  $region1: #{tpu_custom_call.1} parent=0
    #allocation2 [shape = 'u8[4096]{0}', space=vmem, size = 0x1000, scoped, tag = 'output window, operand 0, single buffered']
    #allocation3 [shape = 's32[1]{0}', space=sflag, size = 0x4, scoped, tag = 'scoped memory for tpu_custom_call.1']
    %13 = vsyncpa [#allocation3], 0
    // Predicated region
    $region2: #{tpu_custom_call.1} parent=1 // pred_check
      _
    $region3: #{tpu_custom_call.1} parent=1 // pred_check_branch
      %15 = sbr.rel (0) target = $region5
    $region4: #{tpu_custom_call.1} parent=1 // pred_region
      _
    $region5: #{tpu_custom_call.1} parent=1 // pred_fallthru
      _
    // Predicated region
    $region6: #{tpu_custom_call.1} parent=1 // pred_check
      _
    $region7: #{tpu_custom_call.1} parent=1 // pred_check_branch
      %17 = sbr.rel (0) target = $region9
    $region8: #{tpu_custom_call.1} parent=1 // pred_region
      _
    $region9: #{tpu_custom_call.1} parent=1 // pred_fallthru
      _
    // Predicated region
    $region10: #{tpu_custom_call.1} parent=1 // pred_check
      _
    $region11: #{tpu_custom_call.1} parent=1 // pred_check_branch
      %19 = sbr.rel (0) target = $region13
    $region12: #{tpu_custom_call.1} parent=1 // pred_region
      _
    $region13: #{tpu_custom_call.1} parent=1 // pred_fallthru
      _
    // Predicated region
    $region14: #{tpu_custom_call.1} parent=1 // pred_check
      _
    $region15: #{tpu_custom_call.1} parent=1 // pred_check_branch
      %21 = sbr.rel (0) target = $region17
    $region16: #{tpu_custom_call.1} parent=1 // pred_region
      _
    $region17: #{tpu_custom_call.1} parent=1 // pred_fallthru
      _
    // Predicated region
    $region18: #{tpu_custom_call.1} parent=1 // pred_check
      _
    $region19: #{tpu_custom_call.1} parent=1 // pred_check_branch
      %23 = sbr.rel (0) target = $region21
    $region20: #{tpu_custom_call.1} parent=1 // pred_region
      _
    $region21: #{tpu_custom_call.1} parent=1 // pred_fallthru
      _
    // Predicated region
    $region22: #{tpu_custom_call.1} parent=1 // pred_check
      _
    $region23: #{tpu_custom_call.1} parent=1 // pred_check_branch
      %25 = sbr.rel (0) target = $region25
    $region24: #{tpu_custom_call.1} parent=1 // pred_region
      _
    $region25: #{tpu_custom_call.1} parent=1 // pred_fallthru
      _
    // Predicated region
    $region26: #{tpu_custom_call.1} parent=1 // pred_check
      _
    $region27: #{tpu_custom_call.1} parent=1 // pred_check_branch
      %27 = sbr.rel (0) target = $region29
    $region28: #{tpu_custom_call.1} parent=1 // pred_region
      _
    $region29: #{tpu_custom_call.1} parent=1 // pred_fallthru
      _
    // Predicated region
    $region30: #{tpu_custom_call.1} parent=1 // pred_check
      _
    $region31: #{tpu_custom_call.1} parent=1 // pred_check_branch
      %29 = sbr.rel (0) target = $region33
    $region32: #{tpu_custom_call.1} parent=1 // pred_region
      _
    $region33: #{tpu_custom_call.1} parent=1 // pred_fallthru
      _
    %v30 = vld [vmem:[%s0] sm:$0xff]
    %v31 = vld [vmem:[%s0 + $0x8] sm:$0xff]
    %v32 = vld [vmem:[%s0 + $0x10] sm:$0xff]
    %v33 = vld [vmem:[%s0 + $0x18] sm:$0xff]
    %v34 = vld [vmem:[%s0 + $0x20] sm:$0xff]
    %v35 = vld [vmem:[%s0 + $0x28] sm:$0xff]
    %v36 = vld [vmem:[%s0 + $0x30] sm:$0xff]
    %v37 = vld [vmem:[%s0 + $0x38] sm:$0xff]
    %v38 = vld [vmem:[%s3] sm:$0xff]
    %v39 = vld [vmem:[%s3 + $0x8] sm:$0xff]
    %v40 = vld [vmem:[%s4] sm:$0x1]
    %v42 = vperm.slane %v40, 0
    %vm44 = vcmask 130048
    %v46 = vsel %vm44, %v30, 0
    %v49 = vsel %vm44, %v31, 0
    %v52 = vsel %vm44, %v32, 0
    %v55 = vsel %vm44, %v33, 0
    %v58 = vsel %vm44, %v34, 0
    %v61 = vsel %vm44, %v35, 0
    %v64 = vsel %vm44, %v36, 0
    %v67 = vsel %vm44, %v37, 0
    %69 = vmatpush.msra.mxu0 0.0
    %70 = vmatpush.msra.mxu0 0.0
    %71 = vmatpush.msra.mxu0 0.0
    %72 = vmatpush.msra.mxu0 0.0
    %73 = vmatpush.msra.mxu0 0.0
    %74 = vmatpush.msra.mxu0 0.0
    %75 = vmatpush.msra.mxu0 0.0
    %76 = vmatpush.msra.mxu0 0.0
    %77 = vmatpush.msra.mxu0 0.0
    %78 = vmatpush.msra.mxu0 0.0
    %79 = vmatpush.msra.mxu0 0.0
    %80 = vmatpush.msra.mxu0 0.0
    %81 = vmatpush.msra.mxu0 0.0
    %82 = vmatpush.msra.mxu0 0.0
    %83 = vmatpush.msra.mxu0 %v39
    %84 = vmatpush.msra.mxu0 %v38
    %85 = vmatmul.f32.gmra.mxu0 %v46
    %v86 = vpop.f32.mrf.mxu0
    %v87 = vadd.f32 %v42, %v86
    %88 = vmatmul.f32.gmra.mxu0 %v49
    %v89 = vpop.f32.mrf.mxu0
    %v90 = vadd.f32 %v42, %v89
    %91 = vmatmul.f32.gmra.mxu0 %v52
    %v92 = vpop.f32.mrf.mxu0
    %v93 = vadd.f32 %v42, %v92
    %94 = vmatmul.f32.gmra.mxu0 %v55
    %v95 = vpop.f32.mrf.mxu0
    %v96 = vadd.f32 %v42, %v95
    %97 = vmatmul.f32.gmra.mxu0 %v58
    %v98 = vpop.f32.mrf.mxu0
    %v99 = vadd.f32 %v42, %v98
    %100 = vmatmul.f32.gmra.mxu0 %v61
    %v101 = vpop.f32.mrf.mxu0
    %v102 = vadd.f32 %v42, %v101
    %103 = vmatmul.f32.gmra.mxu0 %v64
    %v104 = vpop.f32.mrf.mxu0
    %v105 = vadd.f32 %v42, %v104
    %106 = vmatmul.f32.gmra.mxu0 %v67
    %v107 = vpop.f32.mrf.mxu0
    %v108 = vadd.f32 %v42, %v107
    %109 = vdwg.mxu0
    %v110 = vld [vmem:[%s0] sm:$0xff]
    %v111 = vld [vmem:[%s1] sm:$0xff]
    %v112 = vld [vmem:[%s1 + $0x8] sm:$0xff]
    %v113 = vld [vmem:[%s2] sm:$0x1]
    %v115 = vperm.slane %v113, 0
    %v118 = vsel %vm44, %v110, 0
    %120 = vmatpush.msra.mxu0 0.0
    %121 = vmatpush.msra.mxu0 0.0
    %122 = vmatpush.msra.mxu0 0.0
    %123 = vmatpush.msra.mxu0 0.0
    %124 = vmatpush.msra.mxu0 0.0
    %125 = vmatpush.msra.mxu0 0.0
    %126 = vmatpush.msra.mxu0 0.0
    %127 = vmatpush.msra.mxu0 0.0
    %128 = vmatpush.msra.mxu0 0.0
    %129 = vmatpush.msra.mxu0 0.0
    %130 = vmatpush.msra.mxu0 0.0
    %131 = vmatpush.msra.mxu0 0.0
    %132 = vmatpush.msra.mxu0 0.0
    %133 = vmatpush.msra.mxu0 0.0
    %134 = vmatpush.msra.mxu0 %v112
    %135 = vmatpush.msra.mxu0 %v111
    %136 = vmatmul.f32.gmra.mxu0 %v118
    %v137 = vpop.f32.mrf.mxu0
    %v138 = vadd.f32 %v115, %v137
    %139 = vdwg.mxu0
    %v140 = vxor.u32 %v138, 2147483648
    %v141 = vmul.f32 %v140, 1.442695
    %v142 = vpow.pop %v141
    %v143 = vadd.f32 %v142, 1.0
    %v144 = vrcp.pop %v143
    %v145 = vmul.f32 %v143, %v144
    %v146 = vsub.f32 1.0, %v145
    %v147 = vmul.f32 %v144, %v146
    %v148 = vadd.f32 %v144, %v147
    %vm149 = vweird.f32 %v143
    %vm150 = vweird.f32 %v144
    %vm151 = vmor %vm149, %vm150
    %v152 = vsel %vm151, %v144, %v148
    %v153 = vand.u32 2147483647, %v143
    %vm154 = vcmp.eq.f32.partialorder %v153, 8.507059e+37
    %v155 = vand.u32 %v143, 2147483648
    %v156 = vor.u32 1.1754944e-38, %v155
    %v157 = vsel %vm154, %v156, %v152
    %v158 = vmul.f32 1.0, %v157
    %v159 = vtanh.pop %v138
    %161 = vrot.lane.b32.xlu0 %v159, 32
    %v162 = vpop.permute.xlu0 %161
    %v164 = vmul.f32 %v158, %v162
    %v165 = vtanh.pop %v164
    %167 = vrot.lane.b32.xlu0 %v165, 64
    %v168 = vpop.permute.xlu0 %167
    %v170 = vmul.f32 %v158, %v168
    %v171 = vld [vmem:[%s5] sm:$0xff]
    %v172 = vld [vmem:[%s5 + $0x8] sm:$0xff]
    %v173 = vld [vmem:[%s5 + $0x10] sm:$0xff]
    %v174 = vld [vmem:[%s5 + $0x18] sm:$0xff]
    %v175 = vxor.u32 %v108, 2147483648
    %v176 = vmul.f32 %v175, 1.442695
    %v177 = vpow.pop %v176
    %v178 = vadd.f32 %v177, 1.0
    %v179 = vrcp.pop %v178
    %v180 = vmul.f32 %v178, %v179
    %v181 = vsub.f32 1.0, %v180
    %v182 = vmul.f32 %v179, %v181
    %v183 = vadd.f32 %v179, %v182
    %vm184 = vweird.f32 %v178
    %vm185 = vweird.f32 %v179
    %vm186 = vmor %vm184, %vm185
    %v187 = vsel %vm186, %v179, %v183
    %v188 = vand.u32 2147483647, %v178
    %vm189 = vcmp.eq.f32.partialorder %v188, 8.507059e+37
    %v190 = vand.u32 %v178, 2147483648
    %v191 = vor.u32 1.1754944e-38, %v190
    %v192 = vsel %vm189, %v191, %v187
    %v193 = vmul.f32 1.0, %v192
    %v194 = vtanh.pop %v108
    %196 = vrot.lane.b32.xlu0 %v194, 32
    %v197 = vpop.permute.xlu0 %196
    %v199 = vmul.f32 %v193, %v197
    %v200 = vtanh.pop %v199
    %202 = vrot.lane.b32.xlu0 %v200, 64
    %v203 = vpop.permute.xlu0 %202
    %v205 = vmul.f32 %v193, %v203
    %207 = vrot.lane.b32.xlu0 %v205, 64
    %v208 = vpop.permute.xlu0 %207
    %vm209 = vcmask 261120
    %v210 = vsel %vm209, %v208, 0
    %212 = vmatpush.msra.mxu0 0.0
    %213 = vmatpush.msra.mxu0 0.0
    %214 = vmatpush.msra.mxu0 0.0
    %215 = vmatpush.msra.mxu0 0.0
    %216 = vmatpush.msra.mxu0 0.0
    %217 = vmatpush.msra.mxu0 0.0
    %218 = vmatpush.msra.mxu0 0.0
    %219 = vmatpush.msra.mxu0 0.0
    %220 = vmatpush.msra.mxu0 0.0
    %221 = vmatpush.msra.mxu0 0.0
    %222 = vmatpush.msra.mxu0 0.0
    %223 = vmatpush.msra.mxu0 0.0
    %224 = vmatpush.msra.mxu0 %v174
    %225 = vmatpush.msra.mxu0 %v173
    %226 = vmatpush.msra.mxu0 %v172
    %227 = vmatpush.msra.mxu0 %v171
    %228 = vmatmul.f32.gmra.mxu0 %v210
    %v229 = vpop.f32.mrf.mxu0
    %v230 = vadd.f32 0.0, %v229
    %231 = vdwg.mxu0
    %v232 = vadd.f32 %v105, %v230
    %v233 = vxor.u32 %v232, 2147483648
    %v234 = vmul.f32 %v233, 1.442695
    %v235 = vpow.pop %v234
    %v236 = vadd.f32 %v235, 1.0
    %v237 = vrcp.pop %v236
    %v238 = vmul.f32 %v236, %v237
    %v239 = vsub.f32 1.0, %v238
    %v240 = vmul.f32 %v237, %v239
    %v241 = vadd.f32 %v237, %v240
    %vm242 = vweird.f32 %v236
    %vm243 = vweird.f32 %v237
    %vm244 = vmor %vm242, %vm243
    %v245 = vsel %vm244, %v237, %v241
    %v246 = vand.u32 2147483647, %v236
    %vm247 = vcmp.eq.f32.partialorder %v246, 8.507059e+37
    %v248 = vand.u32 %v236, 2147483648
    %v249 = vor.u32 1.1754944e-38, %v248
    %v250 = vsel %vm247, %v249, %v245
    %v251 = vmul.f32 1.0, %v250
    %v252 = vtanh.pop %v232
    %254 = vrot.lane.b32.xlu0 %v199, 32
    %v255 = vpop.permute.xlu0 %254
    %v257 = vmul.f32 %v251, %v255
    %259 = vrot.lane.b32.xlu0 %v252, 32
    %v260 = vpop.permute.xlu0 %259
    %v262 = vmul.f32 %v251, %v260
    %264 = vrot.lane.b32.xlu0 %v262, 32
    %v265 = vpop.permute.xlu0 %264
    %v267 = vadd.f32 %v257, %v265
    %v268 = vtanh.pop %v267
    %270 = vrot.lane.b32.xlu0 %v268, 32
    %v271 = vpop.permute.xlu0 %270
    %v273 = vmul.f32 %v251, %v271
    %275 = vrot.lane.b32.xlu0 %v273, 64
    %v276 = vpop.permute.xlu0 %275
    %v277 = vsel %vm209, %v276, 0
    %279 = vmatpush.msra.mxu0 0.0
    %280 = vmatpush.msra.mxu0 0.0
    %281 = vmatpush.msra.mxu0 0.0
    %282 = vmatpush.msra.mxu0 0.0
    %283 = vmatpush.msra.mxu0 0.0
    %284 = vmatpush.msra.mxu0 0.0
    %285 = vmatpush.msra.mxu0 0.0
    %286 = vmatpush.msra.mxu0 0.0
    %287 = vmatpush.msra.mxu0 0.0
    %288 = vmatpush.msra.mxu0 0.0
    %289 = vmatpush.msra.mxu0 0.0
    %290 = vmatpush.msra.mxu0 0.0
    %291 = vmatpush.msra.mxu0 %v174
    %292 = vmatpush.msra.mxu0 %v173
    %293 = vmatpush.msra.mxu0 %v172
    %294 = vmatpush.msra.mxu0 %v171
    %295 = vmatmul.f32.gmra.mxu0 %v277
    %v296 = vpop.f32.mrf.mxu0
    %v297 = vadd.f32 0.0, %v296
    %298 = vdwg.mxu0
    %v299 = vadd.f32 %v102, %v297
    %v300 = vxor.u32 %v299, 2147483648
    %v301 = vmul.f32 %v300, 1.442695
    %v302 = vpow.pop %v301
    %v303 = vadd.f32 %v302, 1.0
    %v304 = vrcp.pop %v303
    %v305 = vmul.f32 %v303, %v304
    %v306 = vsub.f32 1.0, %v305
    %v307 = vmul.f32 %v304, %v306
    %v308 = vadd.f32 %v304, %v307
    %vm309 = vweird.f32 %v303
    %vm310 = vweird.f32 %v304
    %vm311 = vmor %vm309, %vm310
    %v312 = vsel %vm311, %v304, %v308
    %v313 = vand.u32 2147483647, %v303
    %vm314 = vcmp.eq.f32.partialorder %v313, 8.507059e+37
    %v315 = vand.u32 %v303, 2147483648
    %v316 = vor.u32 1.1754944e-38, %v315
    %v317 = vsel %vm314, %v316, %v312
    %v318 = vmul.f32 1.0, %v317
    %v319 = vtanh.pop %v299
    %v320 = vmul.f32 %v318, %v267
    %322 = vrot.lane.b32.xlu0 %v319, 32
    %v323 = vpop.permute.xlu0 %322
    %v325 = vmul.f32 %v318, %v323
    %327 = vrot.lane.b32.xlu0 %v325, 32
    %v328 = vpop.permute.xlu0 %327
    %v330 = vadd.f32 %v320, %v328
    %v331 = vtanh.pop %v330
    %333 = vrot.lane.b32.xlu0 %v331, 32
    %v334 = vpop.permute.xlu0 %333
    %v336 = vmul.f32 %v318, %v334
    %338 = vrot.lane.b32.xlu0 %v336, 64
    %v339 = vpop.permute.xlu0 %338
    %v340 = vsel %vm209, %v339, 0
    %342 = vmatpush.msra.mxu0 0.0
    %343 = vmatpush.msra.mxu0 0.0
    %344 = vmatpush.msra.mxu0 0.0
    %345 = vmatpush.msra.mxu0 0.0
    %346 = vmatpush.msra.mxu0 0.0
    %347 = vmatpush.msra.mxu0 0.0
    %348 = vmatpush.msra.mxu0 0.0
    %349 = vmatpush.msra.mxu0 0.0
    %350 = vmatpush.msra.mxu0 0.0
    %351 = vmatpush.msra.mxu0 0.0
    %352 = vmatpush.msra.mxu0 0.0
    %353 = vmatpush.msra.mxu0 0.0
    %354 = vmatpush.msra.mxu0 %v174
    %355 = vmatpush.msra.mxu0 %v173
    %356 = vmatpush.msra.mxu0 %v172
    %357 = vmatpush.msra.mxu0 %v171
    %358 = vmatmul.f32.gmra.mxu0 %v340
    %v359 = vpop.f32.mrf.mxu0
    %v360 = vadd.f32 0.0, %v359
    %361 = vdwg.mxu0
    %v362 = vadd.f32 %v99, %v360
    %v363 = vxor.u32 %v362, 2147483648
    %v364 = vmul.f32 %v363, 1.442695
    %v365 = vpow.pop %v364
    %v366 = vadd.f32 %v365, 1.0
    %v367 = vrcp.pop %v366
    %v368 = vmul.f32 %v366, %v367
    %v369 = vsub.f32 1.0, %v368
    %v370 = vmul.f32 %v367, %v369
    %v371 = vadd.f32 %v367, %v370
    %vm372 = vweird.f32 %v366
    %vm373 = vweird.f32 %v367
    %vm374 = vmor %vm372, %vm373
    %v375 = vsel %vm374, %v367, %v371
    %v376 = vand.u32 2147483647, %v366
    %vm377 = vcmp.eq.f32.partialorder %v376, 8.507059e+37
    %v378 = vand.u32 %v366, 2147483648
    %v379 = vor.u32 1.1754944e-38, %v378
    %v380 = vsel %vm377, %v379, %v375
    %v381 = vmul.f32 1.0, %v380
    %v382 = vtanh.pop %v362
    %v383 = vmul.f32 %v381, %v330
    %385 = vrot.lane.b32.xlu0 %v382, 32
    %v386 = vpop.permute.xlu0 %385
    %v388 = vmul.f32 %v381, %v386
    %390 = vrot.lane.b32.xlu0 %v388, 32
    %v391 = vpop.permute.xlu0 %390
    %v393 = vadd.f32 %v383, %v391
    %v394 = vtanh.pop %v393
    %396 = vrot.lane.b32.xlu0 %v394, 32
    %v397 = vpop.permute.xlu0 %396
    %v399 = vmul.f32 %v381, %v397
    %401 = vrot.lane.b32.xlu0 %v399, 64
    %v402 = vpop.permute.xlu0 %401
    %v403 = vsel %vm209, %v402, 0
    %405 = vmatpush.msra.mxu0 0.0
    %406 = vmatpush.msra.mxu0 0.0
    %407 = vmatpush.msra.mxu0 0.0
    %408 = vmatpush.msra.mxu0 0.0
    %409 = vmatpush.msra.mxu0 0.0
    %410 = vmatpush.msra.mxu0 0.0
    %411 = vmatpush.msra.mxu0 0.0
    %412 = vmatpush.msra.mxu0 0.0
    %413 = vmatpush.msra.mxu0 0.0
    %414 = vmatpush.msra.mxu0 0.0
    %415 = vmatpush.msra.mxu0 0.0
    %416 = vmatpush.msra.mxu0 0.0
    %417 = vmatpush.msra.mxu0 %v174
    %418 = vmatpush.msra.mxu0 %v173
    %419 = vmatpush.msra.mxu0 %v172
    %420 = vmatpush.msra.mxu0 %v171
    %421 = vmatmul.f32.gmra.mxu0 %v403
    %v422 = vpop.f32.mrf.mxu0
    %v423 = vadd.f32 0.0, %v422
    %424 = vdwg.mxu0
    %v425 = vadd.f32 %v96, %v423
    %v426 = vxor.u32 %v425, 2147483648
    %v427 = vmul.f32 %v426, 1.442695
    %v428 = vpow.pop %v427
    %v429 = vadd.f32 %v428, 1.0
    %v430 = vrcp.pop %v429
    %v431 = vmul.f32 %v429, %v430
    %v432 = vsub.f32 1.0, %v431
    %v433 = vmul.f32 %v430, %v432
    %v434 = vadd.f32 %v430, %v433
    %vm435 = vweird.f32 %v429
    %vm436 = vweird.f32 %v430
    %vm437 = vmor %vm435, %vm436
    %v438 = vsel %vm437, %v430, %v434
    %v439 = vand.u32 2147483647, %v429
    %vm440 = vcmp.eq.f32.partialorder %v439, 8.507059e+37
    %v441 = vand.u32 %v429, 2147483648
    %v442 = vor.u32 1.1754944e-38, %v441
    %v443 = vsel %vm440, %v442, %v438
    %v444 = vmul.f32 1.0, %v443
    %v445 = vtanh.pop %v425
    %v446 = vmul.f32 %v444, %v393
    %448 = vrot.lane.b32.xlu0 %v445, 32
    %v449 = vpop.permute.xlu0 %448
    %v451 = vmul.f32 %v444, %v449
    %453 = vrot.lane.b32.xlu0 %v451, 32
    %v454 = vpop.permute.xlu0 %453
    %v456 = vadd.f32 %v446, %v454
    %v457 = vtanh.pop %v456
    %459 = vrot.lane.b32.xlu0 %v457, 32
    %v460 = vpop.permute.xlu0 %459
    %v462 = vmul.f32 %v444, %v460
    %464 = vrot.lane.b32.xlu0 %v462, 64
    %v465 = vpop.permute.xlu0 %464
    %v466 = vsel %vm209, %v465, 0
    %468 = vmatpush.msra.mxu0 0.0
    %469 = vmatpush.msra.mxu0 0.0
    %470 = vmatpush.msra.mxu0 0.0
    %471 = vmatpush.msra.mxu0 0.0
    %472 = vmatpush.msra.mxu0 0.0
    %473 = vmatpush.msra.mxu0 0.0
    %474 = vmatpush.msra.mxu0 0.0
    %475 = vmatpush.msra.mxu0 0.0
    %476 = vmatpush.msra.mxu0 0.0
    %477 = vmatpush.msra.mxu0 0.0
    %478 = vmatpush.msra.mxu0 0.0
    %479 = vmatpush.msra.mxu0 0.0
    %480 = vmatpush.msra.mxu0 %v174
    %481 = vmatpush.msra.mxu0 %v173
    %482 = vmatpush.msra.mxu0 %v172
    %483 = vmatpush.msra.mxu0 %v171
    %484 = vmatmul.f32.gmra.mxu0 %v466
    %v485 = vpop.f32.mrf.mxu0
    %v486 = vadd.f32 0.0, %v485
    %487 = vdwg.mxu0
    %v488 = vadd.f32 %v93, %v486
    %v489 = vxor.u32 %v488, 2147483648
    %v490 = vmul.f32 %v489, 1.442695
    %v491 = vpow.pop %v490
    %v492 = vadd.f32 %v491, 1.0
    %v493 = vrcp.pop %v492
    %v494 = vmul.f32 %v492, %v493
    %v495 = vsub.f32 1.0, %v494
    %v496 = vmul.f32 %v493, %v495
    %v497 = vadd.f32 %v493, %v496
    %vm498 = vweird.f32 %v492
    %vm499 = vweird.f32 %v493
    %vm500 = vmor %vm498, %vm499
    %v501 = vsel %vm500, %v493, %v497
    %v502 = vand.u32 2147483647, %v492
    %vm503 = vcmp.eq.f32.partialorder %v502, 8.507059e+37
    %v504 = vand.u32 %v492, 2147483648
    %v505 = vor.u32 1.1754944e-38, %v504
    %v506 = vsel %vm503, %v505, %v501
    %v507 = vmul.f32 1.0, %v506
    %v508 = vtanh.pop %v488
    %v509 = vmul.f32 %v507, %v456
    %511 = vrot.lane.b32.xlu0 %v508, 32
    %v512 = vpop.permute.xlu0 %511
    %v514 = vmul.f32 %v507, %v512
    %516 = vrot.lane.b32.xlu0 %v514, 32
    %v517 = vpop.permute.xlu0 %516
    %v519 = vadd.f32 %v509, %v517
    %v520 = vtanh.pop %v519
    %522 = vrot.lane.b32.xlu0 %v520, 32
    %v523 = vpop.permute.xlu0 %522
    %v525 = vmul.f32 %v507, %v523
    %527 = vrot.lane.b32.xlu0 %v525, 64
    %v528 = vpop.permute.xlu0 %527
    %v529 = vsel %vm209, %v528, 0
    %531 = vmatpush.msra.mxu0 0.0
    %532 = vmatpush.msra.mxu0 0.0
    %533 = vmatpush.msra.mxu0 0.0
    %534 = vmatpush.msra.mxu0 0.0
    %535 = vmatpush.msra.mxu0 0.0
    %536 = vmatpush.msra.mxu0 0.0
    %537 = vmatpush.msra.mxu0 0.0
    %538 = vmatpush.msra.mxu0 0.0
    %539 = vmatpush.msra.mxu0 0.0
    %540 = vmatpush.msra.mxu0 0.0
    %541 = vmatpush.msra.mxu0 0.0
    %542 = vmatpush.msra.mxu0 0.0
    %543 = vmatpush.msra.mxu0 %v174
    %544 = vmatpush.msra.mxu0 %v173
    %545 = vmatpush.msra.mxu0 %v172
    %546 = vmatpush.msra.mxu0 %v171
    %547 = vmatmul.f32.gmra.mxu0 %v529
    %v548 = vpop.f32.mrf.mxu0
    %v549 = vadd.f32 0.0, %v548
    %550 = vdwg.mxu0
    %v551 = vadd.f32 %v90, %v549
    %v552 = vxor.u32 %v551, 2147483648
    %v553 = vmul.f32 %v552, 1.442695
    %v554 = vpow.pop %v553
    %v555 = vadd.f32 %v554, 1.0
    %v556 = vrcp.pop %v555
    %v557 = vmul.f32 %v555, %v556
    %v558 = vsub.f32 1.0, %v557
    %v559 = vmul.f32 %v556, %v558
    %v560 = vadd.f32 %v556, %v559
    %vm561 = vweird.f32 %v555
    %vm562 = vweird.f32 %v556
    %vm563 = vmor %vm561, %vm562
    %v564 = vsel %vm563, %v556, %v560
    %v565 = vand.u32 2147483647, %v555
    %vm566 = vcmp.eq.f32.partialorder %v565, 8.507059e+37
    %v567 = vand.u32 %v555, 2147483648
    %v568 = vor.u32 1.1754944e-38, %v567
    %v569 = vsel %vm566, %v568, %v564
    %v570 = vmul.f32 1.0, %v569
    %v571 = vtanh.pop %v551
    %v572 = vmul.f32 %v570, %v519
    %574 = vrot.lane.b32.xlu0 %v571, 32
    %v575 = vpop.permute.xlu0 %574
    %v577 = vmul.f32 %v570, %v575
    %579 = vrot.lane.b32.xlu0 %v577, 32
    %v580 = vpop.permute.xlu0 %579
    %v582 = vadd.f32 %v572, %v580
    %v583 = vtanh.pop %v582
    %585 = vrot.lane.b32.xlu0 %v583, 32
    %v586 = vpop.permute.xlu0 %585
    %v588 = vmul.f32 %v570, %v586
    %590 = vrot.lane.b32.xlu0 %v588, 64
    %v591 = vpop.permute.xlu0 %590
    %v592 = vsel %vm209, %v591, 0
    %594 = vmatpush.msra.mxu0 0.0
    %595 = vmatpush.msra.mxu0 0.0
    %596 = vmatpush.msra.mxu0 0.0
    %597 = vmatpush.msra.mxu0 0.0
    %598 = vmatpush.msra.mxu0 0.0
    %599 = vmatpush.msra.mxu0 0.0
    %600 = vmatpush.msra.mxu0 0.0
    %601 = vmatpush.msra.mxu0 0.0
    %602 = vmatpush.msra.mxu0 0.0
    %603 = vmatpush.msra.mxu0 0.0
    %604 = vmatpush.msra.mxu0 0.0
    %605 = vmatpush.msra.mxu0 0.0
    %606 = vmatpush.msra.mxu0 %v174
    %607 = vmatpush.msra.mxu0 %v173
    %608 = vmatpush.msra.mxu0 %v172
    %609 = vmatpush.msra.mxu0 %v171
    %610 = vmatmul.f32.gmra.mxu0 %v592
    %v611 = vpop.f32.mrf.mxu0
    %v612 = vadd.f32 0.0, %v611
    %613 = vdwg.mxu0
    %v614 = vadd.f32 %v87, %v612
    %v615 = vxor.u32 %v614, 2147483648
    %v616 = vmul.f32 %v615, 1.442695
    %v617 = vpow.pop %v616
    %v618 = vadd.f32 %v617, 1.0
    %v619 = vrcp.pop %v618
    %v620 = vmul.f32 %v618, %v619
    %v621 = vsub.f32 1.0, %v620
    %v622 = vmul.f32 %v619, %v621
    %v623 = vadd.f32 %v619, %v622
    %vm624 = vweird.f32 %v618
    %vm625 = vweird.f32 %v619
    %vm626 = vmor %vm624, %vm625
    %v627 = vsel %vm626, %v619, %v623
    %v628 = vand.u32 2147483647, %v618
    %vm629 = vcmp.eq.f32.partialorder %v628, 8.507059e+37
    %v630 = vand.u32 %v618, 2147483648
    %v631 = vor.u32 1.1754944e-38, %v630
    %v632 = vsel %vm629, %v631, %v627
    %v633 = vmul.f32 1.0, %v632
    %v634 = vtanh.pop %v614
    %v635 = vmul.f32 %v633, %v582
    %637 = vrot.lane.b32.xlu0 %v634, 32
    %v638 = vpop.permute.xlu0 %637
    %v640 = vmul.f32 %v633, %v638
    %642 = vrot.lane.b32.xlu0 %v640, 32
    %v643 = vpop.permute.xlu0 %642
    %v645 = vadd.f32 %v635, %v643
    %v646 = vtanh.pop %v645
    %648 = vrot.lane.b32.xlu0 %v646, 32
    %v649 = vpop.permute.xlu0 %648
    %v651 = vmul.f32 %v633, %v649
    %v652 = vadd.f32 %v170, %v651
    %v653 = vld [vmem:[%s6] sm:$0xff]
    %v654 = vld [vmem:[%s6 + $0x8] sm:$0xff]
    %v655 = vld [vmem:[%s6 + $0x10] sm:$0xff]
    %v656 = vld [vmem:[%s6 + $0x18] sm:$0xff]
    %v657 = vld [vmem:[%s7] sm:$0x1]
    %v659 = vperm.slane %v657, 0
    %662 = vrot.lane.b32.xlu0 %v652, 64
    %v663 = vpop.permute.xlu0 %662
    %v664 = vsel %vm209, %v663, 0
    %666 = vmatpush.msra.mxu0 0.0
    %667 = vmatpush.msra.mxu0 0.0
    %668 = vmatpush.msra.mxu0 0.0
    %669 = vmatpush.msra.mxu0 0.0
    %670 = vmatpush.msra.mxu0 0.0
    %671 = vmatpush.msra.mxu0 0.0
    %672 = vmatpush.msra.mxu0 0.0
    %673 = vmatpush.msra.mxu0 0.0
    %674 = vmatpush.msra.mxu0 0.0
    %675 = vmatpush.msra.mxu0 0.0
    %676 = vmatpush.msra.mxu0 0.0
    %677 = vmatpush.msra.mxu0 0.0
    %678 = vmatpush.msra.mxu0 %v656
    %679 = vmatpush.msra.mxu0 %v655
    %680 = vmatpush.msra.mxu0 %v654
    %681 = vmatpush.msra.mxu0 %v653
    %682 = vmatmul.f32.gmra.mxu0 %v664
    %v683 = vpop.f32.mrf.mxu0
    %v684 = vadd.f32 %v659, %v683
    %685 = vdwg.mxu0
    %vm686 = vcmask 64512
    %v687 = vsel %vm686, %v684, -inf
    %688 = vmax.xlane.f32.xlu0 %v687
    %v689 = vpop.xlane.xlu0 %688
    %v690 = vsub.f32 %v684, %v689
    %v691 = vmul.f32 %v690, 1.442695
    %v692 = vpow.pop %v691
    %v693 = vsel %vm686, %v692, 0.0
    %694 = vadd.xlane.f32.xlu0 %v693
    %v695 = vpop.xlane.xlu0 %694
    %v696 = vrcp.pop %v695
    %v697 = vmul.f32 %v695, %v696
    %v698 = vsub.f32 2.0, %v697
    %v699 = vmul.f32 %v696, %v698
    %v700 = vmul.f32 %v692, %v699
    %701 = vst.msk [vmem:[#allocation2] sm:$0xff] %vm686, %v700
    // Predicated region
    $region34: #{tpu_custom_call.1} parent=1 // pred_check
      _
    $region35: #{tpu_custom_call.1} parent=1 // pred_check_branch
      %703 = sbr.rel (0) target = $region37
    $region36: #{tpu_custom_call.1} parent=1 // pred_region
      %705 = vsyncadd [#allocation3], 0
      %s707 = sshll.u32 [#allocation2], 4
      %s708 = int_to_ptr.vmem [resolvable:$true] %s707
      %s709 = sshll.u32 %s8, 4
      %s710 = int_to_ptr.hbm [resolvable:$true] %s709
      %712 = dma.vmem_to_hbm [thread:$0]  %s708, 128, %s710, [#allocation3]
    $region37: #{tpu_custom_call.1} parent=1 // pred_fallthru
      _
    // Predicated region
    $region38: #{tpu_custom_call.1} parent=1 // pred_check
      _
    $region39: #{tpu_custom_call.1} parent=1 // pred_check_branch
      %714 = sbr.rel (0) target = $region41
    $region40: #{tpu_custom_call.1} parent=1 // pred_region
      %716 = dma.done [#allocation3], 128
    $region41: #{tpu_custom_call.1} parent=1 // pred_fallthru
      _
    %717 = vsyncpa [#allocation3], 1

</llo_original>
